<compile_context>
chip_gen: v7x
topology: tpu7x:2x2x1
jax: 0.10.0
libtpu: 0.0.40
codegen_flags: <defaults>
</compile_context>

<pallas_src>
import functools

import jax
import jax.numpy as jnp
from jax.experimental import pallas as pl
from jax.experimental.pallas import tpu as pltpu


def _ea_raymarch_kernel(d_ref, f_ref, o_ref, *, eps, surface_thickness,
                        feature_dim, num_points, num_rays, tile_rays):
    # Ray-index mask for the (possibly ragged) last tile: (1, TR).
    i = pl.program_id(0)
    lane = jax.lax.broadcasted_iota(jnp.int32, (1, tile_rays), 1)
    valid = (i * tile_rays + lane) < num_rays

    d = d_ref[...].astype(jnp.float32)            # (P, TR), rays on lanes
    d = jnp.where(valid, d, 0.0)                  # zero densities of masked rays
    x = 1.0 + eps - d                             # argument of the shifted cumprod

    one = jnp.ones((1, tile_rays), jnp.float32)
    running = one                                 # cumprod of x up to current point
    history = [one] * surface_thickness           # cumprod delayed by surface_thickness
    opac = one                                    # prod_k (1 - d_k)
    rendered = jnp.zeros((feature_dim, tile_rays), jnp.float32)

    # Scan over points along each ray (P is small; unrolled). Every operand is a
    # lane-dense (1, TR) or (F, TR) slab, so all VPU work uses full 128-lane vregs
    # and per-point feature slabs are cheap leading-axis reads from VMEM.
    # (For very large P a lax.fori_loop scan would bound register pressure.)
    for k in range(num_points):
        dk = d[k:k + 1, :]                        # (1, TR)
        wk = dk * history[0]                      # weights_k = density * shifted cumprod
        rendered = rendered + wk * f_ref[k].astype(jnp.float32)  # (F, TR)
        running = running * x[k:k + 1, :]
        history = history[1:] + [running]
        opac = opac * (1.0 - dk)

    out = jnp.concatenate([rendered, 1.0 - opac], axis=0)        # (F+1, TR)
    o_ref[...] = out.astype(o_ref.dtype)          # single lane-dense full-block store


def _round_up(x, m):
    return ((x + m - 1) // m) * m


def emission_absorption_raymarcher(
    rays_densities,
    rays_features,
    eps: float = 1e-10,
    surface_thickness: int = 1,
    tile_rays: int = 4096,
):
    """JAX/Pallas equivalent of EmissionAbsorptionRaymarcher.forward.

    rays_densities: (..., P, 1), values in [0, 1]
    rays_features : (..., P, F)
    returns       : (..., F + 1)
    """
    if rays_densities.shape[-1] != 1:
        raise ValueError("last dim of rays_densities must be 1")
    if surface_thickness < 1:
        raise ValueError("surface_thickness must be >= 1")
    if rays_features.shape[:-1] != rays_densities.shape[:-1]:
        raise ValueError("rays_features leading dims must match rays_densities")
    # TODO(synk): the torch module's host-side density-range warning has no
    # in-kernel equivalent and is omitted.

    lead = rays_densities.shape[:-2]
    P = rays_densities.shape[-2]
    F = rays_features.shape[-1]

    R = 1
    for s in lead:
        R *= s

    out_dtype = rays_features.dtype

    # Lane-dense layout: rays on the 128-lane axis. No dtype cast and no HBM
    # padding here; the transpose is the only materializing layout op, and the
    # ragged last tile is masked inside the kernel.
    d_t = jnp.transpose(rays_densities.reshape(R, P), (1, 0))          # (P, R)
    f_t = jnp.transpose(rays_features.reshape(R, P, F), (1, 2, 0))     # (P, F, R)

    # Pick the largest ray tile (multiple of 128) whose double-buffered blocks fit
    # a conservative VMEM budget valid across v5e/v6e/v7x default scoped limits.
    itemsize_d = jnp.dtype(d_t.dtype).itemsize
    itemsize_f = jnp.dtype(f_t.dtype).itemsize
    itemsize_o = jnp.dtype(out_dtype).itemsize
    vmem_budget = 12 * 1024 * 1024
    per_ray_bytes = 2 * (                          # x2: double-buffered pipeline
        _round_up(P, 8) * itemsize_d
        + P * _round_up(F, 8) * itemsize_f         # (F, TR) slabs pad F up to 8 sublanes
        + _round_up(F + 1, 8) * itemsize_o
    )
    max_tr = max(128, (vmem_budget // per_ray_bytes) // 128 * 128)
    tr = min(_round_up(tile_rays, 128), max_tr, _round_up(R, 128))

    kernel = functools.partial(
        _ea_raymarch_kernel,
        eps=eps,
        surface_thickness=surface_thickness,
        feature_dim=F,
        num_points=P,
        num_rays=R,
        tile_rays=tr,
    )

    out_t = pl.pallas_call(
        kernel,
        out_shape=jax.ShapeDtypeStruct((F + 1, R), out_dtype),
        grid=(pl.cdiv(R, tr),),
        in_specs=[
            pl.BlockSpec((P, tr), lambda i: (0, i)),
            pl.BlockSpec((P, F, tr), lambda i: (0, 0, i)),
        ],
        out_specs=pl.BlockSpec((F + 1, tr), lambda i: (0, i)),
        compiler_params=pltpu.CompilerParams(dimension_semantics=("parallel",)),
    )(d_t, f_t)

    out = jnp.transpose(out_t, (1, 0))            # (R, F+1)
    return out.reshape(*lead, F + 1)


def _reference(rays_densities, rays_features, eps=1e-10, surface_thickness=1):
    """Pure-JAX reference mirroring the PyTorch module."""
    d = rays_densities[..., 0]
    cp = jnp.cumprod(1.0 + eps - d, axis=-1)
    absorption = jnp.concatenate(
        [jnp.ones_like(cp[..., :surface_thickness]), cp[..., :-surface_thickness]],
        axis=-1,
    )
    weights = d * absorption
    features = (weights[..., None] * rays_features).sum(axis=-2)
    opacities = 1.0 - jnp.prod(1.0 - d, axis=-1, keepdims=True)
    return jnp.concatenate([features, opacities], axis=-1)


if __name__ == "__main__":
    key = jax.random.PRNGKey(0)
    k1, k2 = jax.random.split(key)

    batch, H, W, P, F = 2, 8, 8, 8, 4
    rays_densities = jax.random.uniform(k1, (batch, H, W, P, 1), dtype=jnp.float32)
    rays_features = jax.random.normal(k2, (batch, H, W, P, F), dtype=jnp.float32)

    out = emission_absorption_raymarcher(rays_densities, rays_features)
    out = jax.block_until_ready(out)

    ref = _reference(rays_densities, rays_features)
    assert out.shape == (batch, H, W, F + 1), out.shape
    if not jnp.allclose(out, ref, atol=1e-5, rtol=1e-5):
        raise AssertionError("Pallas kernel output does not match reference")

    print("KERNEL_OK")
</pallas_src>

<mosaic_0001>
module attributes {stable_mosaic.version = 11 : i64} {
  func.func @_ea_raymarch_kernel(%arg0: i32, %arg1: memref<8x128xf32, #tpu.memory_space<vmem>>, %arg2: memref<8x4x128xf32, #tpu.memory_space<vmem>>, %arg3: memref<5x128xf32, #tpu.memory_space<vmem>>) attributes {dimension_semantics = [#tpu.dimension_semantics<parallel>], iteration_bounds = array<i64: 1>, scalar_prefetch = 0 : i64, scratch_operands = 0 : i64, tpu.core_type = #tpu.core_type<tc>, window_params = [{transform_indices = @transform_0, window_bounds = array<i64: 8, 128>}, {transform_indices = @transform_1, window_bounds = array<i64: 8, 4, 128>}, {transform_indices = @transform_2, window_bounds = array<i64: 5, 128>}]} {
    %0 = tpu.iota {dimensions = array<i32: 1>} : vector<1x128xi32>
    %c128_i32 = arith.constant 128 : i32
    %1 = arith.muli %arg0, %c128_i32 : i32
    %2 = vector.broadcast %1 : i32 to vector<1x128xi32>
    %3 = arith.addi %2, %0 : vector<1x128xi32>
    %c128_i32_0 = arith.constant 128 : i32
    %4 = vector.broadcast %c128_i32_0 : i32 to vector<1x128xi32>
    %5 = arith.cmpi slt, %3, %4 : vector<1x128xi32>
    %c0 = arith.constant 0 : index
    %c0_1 = arith.constant 0 : index
    %6 = vector.load %arg1[%c0, %c0_1] : memref<8x128xf32, #tpu.memory_space<vmem>>, vector<8x128xf32>
    %cst = arith.constant 0.000000e+00 : f32
    %7 = vector.shape_cast %5 : vector<1x128xi1> to vector<1x128xi1>
    %8 = vector.broadcast %7 : vector<1x128xi1> to vector<8x128xi1>
    %9 = vector.broadcast %cst : f32 to vector<8x128xf32>
    %10 = arith.select %8, %6, %9 : vector<8x128xi1>, vector<8x128xf32>
    %cst_2 = arith.constant 1.000000e+00 : f32
    %11 = vector.broadcast %cst_2 : f32 to vector<8x128xf32>
    %12 = arith.subf %11, %10 : vector<8x128xf32>
    %cst_3 = arith.constant 1.000000e+00 : f32
    %13 = vector.broadcast %cst_3 : f32 to vector<1x128xf32>
    %cst_4 = arith.constant 0.000000e+00 : f32
    %14 = vector.broadcast %cst_4 : f32 to vector<4x128xf32>
    %15 = vector.extract_strided_slice %10 {offsets = [0, 0], sizes = [1, 128], strides = [1, 1]} : vector<8x128xf32> to vector<1x128xf32>
    %16 = arith.mulf %15, %13 : vector<1x128xf32>
    %c0_5 = arith.constant 0 : index
    %c0_6 = arith.constant 0 : index
    %c0_7 = arith.constant 0 : index
    %17 = vector.load %arg2[%c0_5, %c0_6, %c0_7] : memref<8x4x128xf32, #tpu.memory_space<vmem>>, vector<1x4x128xf32>
    %18 = vector.shape_cast %17 : vector<1x4x128xf32> to vector<4x128xf32>
    %19 = vector.broadcast %16 : vector<1x128xf32> to vector<4x128xf32>
    %20 = arith.mulf %19, %18 : vector<4x128xf32>
    %21 = arith.addf %14, %20 : vector<4x128xf32>
    %22 = vector.extract_strided_slice %12 {offsets = [0, 0], sizes = [1, 128], strides = [1, 1]} : vector<8x128xf32> to vector<1x128xf32>
    %23 = arith.mulf %13, %22 : vector<1x128xf32>
    %cst_8 = arith.constant 1.000000e+00 : f32
    %24 = vector.broadcast %cst_8 : f32 to vector<1x128xf32>
    %25 = arith.subf %24, %15 : vector<1x128xf32>
    %26 = arith.mulf %13, %25 : vector<1x128xf32>
    %27 = vector.extract_strided_slice %10 {offsets = [1, 0], sizes = [1, 128], strides = [1, 1]} : vector<8x128xf32> to vector<1x128xf32>
    %28 = arith.mulf %27, %23 : vector<1x128xf32>
    %c1 = arith.constant 1 : index
    %c0_9 = arith.constant 0 : index
    %c0_10 = arith.constant 0 : index
    %29 = vector.load %arg2[%c1, %c0_9, %c0_10] : memref<8x4x128xf32, #tpu.memory_space<vmem>>, vector<1x4x128xf32>
    %30 = vector.shape_cast %29 : vector<1x4x128xf32> to vector<4x128xf32>
    %31 = vector.broadcast %28 : vector<1x128xf32> to vector<4x128xf32>
    %32 = arith.mulf %31, %30 : vector<4x128xf32>
    %33 = arith.addf %21, %32 : vector<4x128xf32>
    %34 = vector.extract_strided_slice %12 {offsets = [1, 0], sizes = [1, 128], strides = [1, 1]} : vector<8x128xf32> to vector<1x128xf32>
    %35 = arith.mulf %23, %34 : vector<1x128xf32>
    %cst_11 = arith.constant 1.000000e+00 : f32
    %36 = vector.broadcast %cst_11 : f32 to vector<1x128xf32>
    %37 = arith.subf %36, %27 : vector<1x128xf32>
    %38 = arith.mulf %26, %37 : vector<1x128xf32>
    %39 = vector.extract_strided_slice %10 {offsets = [2, 0], sizes = [1, 128], strides = [1, 1]} : vector<8x128xf32> to vector<1x128xf32>
    %40 = arith.mulf %39, %35 : vector<1x128xf32>
    %c2 = arith.constant 2 : index
    %c0_12 = arith.constant 0 : index
    %c0_13 = arith.constant 0 : index
    %41 = vector.load %arg2[%c2, %c0_12, %c0_13] : memref<8x4x128xf32, #tpu.memory_space<vmem>>, vector<1x4x128xf32>
    %42 = vector.shape_cast %41 : vector<1x4x128xf32> to vector<4x128xf32>
    %43 = vector.broadcast %40 : vector<1x128xf32> to vector<4x128xf32>
    %44 = arith.mulf %43, %42 : vector<4x128xf32>
    %45 = arith.addf %33, %44 : vector<4x128xf32>
    %46 = vector.extract_strided_slice %12 {offsets = [2, 0], sizes = [1, 128], strides = [1, 1]} : vector<8x128xf32> to vector<1x128xf32>
    %47 = arith.mulf %35, %46 : vector<1x128xf32>
    %cst_14 = arith.constant 1.000000e+00 : f32
    %48 = vector.broadcast %cst_14 : f32 to vector<1x128xf32>
    %49 = arith.subf %48, %39 : vector<1x128xf32>
    %50 = arith.mulf %38, %49 : vector<1x128xf32>
    %51 = vector.extract_strided_slice %10 {offsets = [3, 0], sizes = [1, 128], strides = [1, 1]} : vector<8x128xf32> to vector<1x128xf32>
    %52 = arith.mulf %51, %47 : vector<1x128xf32>
    %c3 = arith.constant 3 : index
    %c0_15 = arith.constant 0 : index
    %c0_16 = arith.constant 0 : index
    %53 = vector.load %arg2[%c3, %c0_15, %c0_16] : memref<8x4x128xf32, #tpu.memory_space<vmem>>, vector<1x4x128xf32>
    %54 = vector.shape_cast %53 : vector<1x4x128xf32> to vector<4x128xf32>
    %55 = vector.broadcast %52 : vector<1x128xf32> to vector<4x128xf32>
    %56 = arith.mulf %55, %54 : vector<4x128xf32>
    %57 = arith.addf %45, %56 : vector<4x128xf32>
    %58 = vector.extract_strided_slice %12 {offsets = [3, 0], sizes = [1, 128], strides = [1, 1]} : vector<8x128xf32> to vector<1x128xf32>
    %59 = arith.mulf %47, %58 : vector<1x128xf32>
    %cst_17 = arith.constant 1.000000e+00 : f32
    %60 = vector.broadcast %cst_17 : f32 to vector<1x128xf32>
    %61 = arith.subf %60, %51 : vector<1x128xf32>
    %62 = arith.mulf %50, %61 : vector<1x128xf32>
    %63 = vector.extract_strided_slice %10 {offsets = [4, 0], sizes = [1, 128], strides = [1, 1]} : vector<8x128xf32> to vector<1x128xf32>
    %64 = arith.mulf %63, %59 : vector<1x128xf32>
    %c4 = arith.constant 4 : index
    %c0_18 = arith.constant 0 : index
    %c0_19 = arith.constant 0 : index
    %65 = vector.load %arg2[%c4, %c0_18, %c0_19] : memref<8x4x128xf32, #tpu.memory_space<vmem>>, vector<1x4x128xf32>
    %66 = vector.shape_cast %65 : vector<1x4x128xf32> to vector<4x128xf32>
    %67 = vector.broadcast %64 : vector<1x128xf32> to vector<4x128xf32>
    %68 = arith.mulf %67, %66 : vector<4x128xf32>
    %69 = arith.addf %57, %68 : vector<4x128xf32>
    %70 = vector.extract_strided_slice %12 {offsets = [4, 0], sizes = [1, 128], strides = [1, 1]} : vector<8x128xf32> to vector<1x128xf32>
    %71 = arith.mulf %59, %70 : vector<1x128xf32>
    %cst_20 = arith.constant 1.000000e+00 : f32
    %72 = vector.broadcast %cst_20 : f32 to vector<1x128xf32>
    %73 = arith.subf %72, %63 : vector<1x128xf32>
    %74 = arith.mulf %62, %73 : vector<1x128xf32>
    %75 = vector.extract_strided_slice %10 {offsets = [5, 0], sizes = [1, 128], strides = [1, 1]} : vector<8x128xf32> to vector<1x128xf32>
    %76 = arith.mulf %75, %71 : vector<1x128xf32>
    %c5 = arith.constant 5 : index
    %c0_21 = arith.constant 0 : index
    %c0_22 = arith.constant 0 : index
    %77 = vector.load %arg2[%c5, %c0_21, %c0_22] : memref<8x4x128xf32, #tpu.memory_space<vmem>>, vector<1x4x128xf32>
    %78 = vector.shape_cast %77 : vector<1x4x128xf32> to vector<4x128xf32>
    %79 = vector.broadcast %76 : vector<1x128xf32> to vector<4x128xf32>
    %80 = arith.mulf %79, %78 : vector<4x128xf32>
    %81 = arith.addf %69, %80 : vector<4x128xf32>
    %82 = vector.extract_strided_slice %12 {offsets = [5, 0], sizes = [1, 128], strides = [1, 1]} : vector<8x128xf32> to vector<1x128xf32>
    %83 = arith.mulf %71, %82 : vector<1x128xf32>
    %cst_23 = arith.constant 1.000000e+00 : f32
    %84 = vector.broadcast %cst_23 : f32 to vector<1x128xf32>
    %85 = arith.subf %84, %75 : vector<1x128xf32>
    %86 = arith.mulf %74, %85 : vector<1x128xf32>
    %87 = vector.extract_strided_slice %10 {offsets = [6, 0], sizes = [1, 128], strides = [1, 1]} : vector<8x128xf32> to vector<1x128xf32>
    %88 = arith.mulf %87, %83 : vector<1x128xf32>
    %c6 = arith.constant 6 : index
    %c0_24 = arith.constant 0 : index
    %c0_25 = arith.constant 0 : index
    %89 = vector.load %arg2[%c6, %c0_24, %c0_25] : memref<8x4x128xf32, #tpu.memory_space<vmem>>, vector<1x4x128xf32>
    %90 = vector.shape_cast %89 : vector<1x4x128xf32> to vector<4x128xf32>
    %91 = vector.broadcast %88 : vector<1x128xf32> to vector<4x128xf32>
    %92 = arith.mulf %91, %90 : vector<4x128xf32>
    %93 = arith.addf %81, %92 : vector<4x128xf32>
    %94 = vector.extract_strided_slice %12 {offsets = [6, 0], sizes = [1, 128], strides = [1, 1]} : vector<8x128xf32> to vector<1x128xf32>
    %95 = arith.mulf %83, %94 : vector<1x128xf32>
    %cst_26 = arith.constant 1.000000e+00 : f32
    %96 = vector.broadcast %cst_26 : f32 to vector<1x128xf32>
    %97 = arith.subf %96, %87 : vector<1x128xf32>
    %98 = arith.mulf %86, %97 : vector<1x128xf32>
    %99 = vector.extract_strided_slice %10 {offsets = [7, 0], sizes = [1, 128], strides = [1, 1]} : vector<8x128xf32> to vector<1x128xf32>
    %100 = arith.mulf %99, %95 : vector<1x128xf32>
    %c7 = arith.constant 7 : index
    %c0_27 = arith.constant 0 : index
    %c0_28 = arith.constant 0 : index
    %101 = vector.load %arg2[%c7, %c0_27, %c0_28] : memref<8x4x128xf32, #tpu.memory_space<vmem>>, vector<1x4x128xf32>
    %102 = vector.shape_cast %101 : vector<1x4x128xf32> to vector<4x128xf32>
    %103 = vector.broadcast %100 : vector<1x128xf32> to vector<4x128xf32>
    %104 = arith.mulf %103, %102 : vector<4x128xf32>
    %105 = arith.addf %93, %104 : vector<4x128xf32>
    %cst_29 = arith.constant 1.000000e+00 : f32
    %106 = vector.broadcast %cst_29 : f32 to vector<1x128xf32>
    %107 = arith.subf %106, %99 : vector<1x128xf32>
    %108 = arith.mulf %98, %107 : vector<1x128xf32>
    %cst_30 = arith.constant 1.000000e+00 : f32
    %109 = vector.broadcast %cst_30 : f32 to vector<1x128xf32>
    %110 = arith.subf %109, %108 : vector<1x128xf32>
    %111 = tpu.concatenate %105, %110 in 0 : vector<4x128xf32>, vector<1x128xf32> -> vector<5x128xf32>
    %c0_31 = arith.constant 0 : index
    %c0_32 = arith.constant 0 : index
    %112 = vector.load %arg3[%c0_31, %c0_32] : memref<5x128xf32, #tpu.memory_space<vmem>>, vector<5x128xf32>
    tpu.vector_store %arg3[%c0_31, %c0_32], %111 {strides = array<i32>} : memref<5x128xf32, #tpu.memory_space<vmem>>, vector<5x128xf32>,
    return
  }
  func.func @transform_0(%arg0: i32) -> (i32, i32) {
    %c0_i32 = arith.constant 0 : i32
    %c0_i32_0 = arith.constant 0 : i32
    return %c0_i32, %arg0 : i32, i32
  }
  func.func @transform_1(%arg0: i32) -> (i32, i32, i32) {
    %c0_i32 = arith.constant 0 : i32
    %c0_i32_0 = arith.constant 0 : i32
    %c0_i32_1 = arith.constant 0 : i32
    return %c0_i32, %c0_i32_0, %arg0 : i32, i32, i32
  }
  func.func @transform_2(%arg0: i32) -> (i32, i32) {
    %c0_i32 = arith.constant 0 : i32
    %c0_i32_0 = arith.constant 0 : i32
    return %c0_i32, %arg0 : i32, i32
  }
}

</mosaic_0001>

<llo_original>
// kernel: tpu_custom_call.1
$region0: #{tpu_custom_call.1}
  #allocation0 [shape = 'u32[]', space=smem, size = 0x4, offset = 0x4, fixed_abs, tag = 'smem constant byte address 0x4 - core index']
  #allocation1 [shape = 'u32[144,128]{1,0:T(1,128)}', space=vmem, size = 0x12000, scoped, tag = 'internal scratch']
  %s0 = inlined_call_operand.hbm [shape: f32[8,128], index: 0, kind: input, shape index: {}]
  %s1 = inlined_call_operand.hbm [shape: f32[8,4,128], index: 1, kind: input, shape index: {}]
  %s2 = inlined_call_operand.hbm [shape: f32[5,128], index: 2, kind: output, shape index: {}]
  %s3 = sld [smem:[#allocation0]]
  $region26: #{tpu_custom_call.1} parent=0
    _
  %s5 = ssub.s32 1, %s3
  %s6 = scalar_select 0, %s5, %s3
  $region1: #{tpu_custom_call.1} parent=0
    #allocation2 [shape = 'u8[4096]{0}', space=vmem, size = 0x1000, scoped, tag = 'input window, operand 0, single buffered']
    #allocation3 [shape = 's32[1]{0}', space=sflag, size = 0x4, scoped, tag = 'scoped memory for tpu_custom_call.1']
    #allocation4 [shape = 's32[1]{0}', space=sflag, size = 0x4, scoped, tag = 'scoped memory for tpu_custom_call.1']
    #allocation5 [shape = 'u8[16384]{0}', space=vmem, size = 0x4000, scoped, tag = 'input window, operand 1, single buffered']
    #allocation6 [shape = 's32[1]{0}', space=sflag, size = 0x4, scoped, tag = 'scoped memory for tpu_custom_call.1']
    #allocation7 [shape = 'u8[4096]{0}', space=vmem, size = 0x1000, scoped, tag = 'output window, operand 0, single buffered']
    %7 = vsyncpa [#allocation3], 0
    %8 = vsyncpa [#allocation6], 0
    %9 = vsyncpa [#allocation4], 0
    // Predicated region
    $region2: #{tpu_custom_call.1} parent=1 // pred_check
      _
    $region3: #{tpu_custom_call.1} parent=1 // pred_check_branch
      %11 = sbr.rel (0) target = $region5
    $region4: #{tpu_custom_call.1} parent=1 // pred_region
      %s13 = ssub.s32 128, 128
      %14 = vsyncadd [#allocation3], %s13
      %s16 = sshll.u32 [#allocation2], 4
      %s17 = int_to_ptr.vmem [resolvable:$true] %s16
      %19 = dma.hbm_to_vmem [thread:$0]  %s0, 128, %s17, [#allocation3]
    $region5: #{tpu_custom_call.1} parent=1 // pred_fallthru
      _
    // Predicated region
    $region6: #{tpu_custom_call.1} parent=1 // pred_check
      _
    $region7: #{tpu_custom_call.1} parent=1 // pred_check_branch
      %21 = sbr.rel (0) target = $region9
    $region8: #{tpu_custom_call.1} parent=1 // pred_region
      %s23 = ssub.s32 512, 512
      %24 = vsyncadd [#allocation6], %s23
      %s25 = sshll.u32 [#allocation5], 4
      %s26 = int_to_ptr.vmem [resolvable:$true] %s25
      %31 = dma.hbm_to_vmem [thread:$0]  %s1, 512, %s26, [#allocation6], 64, 64, 4
    $region9: #{tpu_custom_call.1} parent=1 // pred_fallthru
      _
    // Predicated region
    $region10: #{tpu_custom_call.1} parent=1 // pred_check
      _
    $region11: #{tpu_custom_call.1} parent=1 // pred_check_branch
      %33 = sbr.rel (0) target = $region13
    $region12: #{tpu_custom_call.1} parent=1 // pred_region
      %34 = dma.done [#allocation3], 128
    $region13: #{tpu_custom_call.1} parent=1 // pred_fallthru
      _
    // Predicated region
    $region14: #{tpu_custom_call.1} parent=1 // pred_check
      _
    $region15: #{tpu_custom_call.1} parent=1 // pred_check_branch
      %36 = sbr.rel (0) target = $region17
    $region16: #{tpu_custom_call.1} parent=1 // pred_region
      %37 = dma.done [#allocation6], 512
    $region17: #{tpu_custom_call.1} parent=1 // pred_fallthru
      _
    %v38 = vlaneseq
    %v39 = vand.u32 %v38, 127
    %s40 = smul.u32 0, 128
    %v41 = vstv %s40
    %v42 = vadd.s32 %v41, %v39
    %vm43 = vcmp.lt.s32.totalorder %v42, 128
    %v44 = vld [vmem:[#allocation2] sm:$0xff]
    %v45 = vsel %vm43, 1, 0
    %vm46 = vcmp.eq.s32.totalorder %v45, 1
    %v47 = vsel %vm46, %v44, 0.0
    %v48 = vsub.f32 1.0, %v47
    %v49 = vld [vmem:[#allocation5] sm:$0xf]
    %v50 = vlaneseq
    %v51 = vshrl.u32 %v50, 7
    %v52 = vsub.s32 0, %v51
    %v53 = vrot.slane %v47, %v52
    %v54 = vmul.f32 %v53, %v49
    %v55 = vadd.f32 %v54, 0.0
    %v57 = vrot.slane %v48, 7
    %v59 = vmul.f32 %v47, %v57
    %s60 = scalar_lea.vmem [#allocation5], 4
    %v61 = vld [vmem:[%s60] sm:$0xf]
    %v62 = vlaneseq
    %v63 = vshrl.u32 %v62, 7
    %v64 = vsub.s32 1, %v63
    %v65 = vrot.slane %v59, %v64
    %v66 = vmul.f32 %v65, %v61
    %v67 = vadd.f32 %v55, %v66
    %v68 = vrot.slane %v48, 1
    %v70 = vmul.f32 %v48, %v68
    %v72 = vrot.slane %v70, 6
    %v74 = vmul.f32 %v47, %v72
    %s75 = scalar_lea.vmem [#allocation5], 8
    %v76 = vld [vmem:[%s75] sm:$0xf]
    %v77 = vlaneseq
    %v78 = vshrl.u32 %v77, 7
    %v79 = vsub.s32 2, %v78
    %v80 = vrot.slane %v74, %v79
    %v81 = vmul.f32 %v80, %v76
    %v82 = vadd.f32 %v67, %v81
    %v83 = vrot.slane %v48, 2
    %v85 = vmul.f32 %v70, %v83
    %v87 = vrot.slane %v85, 5
    %v89 = vmul.f32 %v47, %v87
    %s90 = scalar_lea.vmem [#allocation5], 12
    %v91 = vld [vmem:[%s90] sm:$0xf]
    %v92 = vlaneseq
    %v93 = vshrl.u32 %v92, 7
    %v94 = vsub.s32 3, %v93
    %v95 = vrot.slane %v89, %v94
    %v96 = vmul.f32 %v95, %v91
    %v97 = vadd.f32 %v82, %v96
    %v98 = vrot.slane %v48, 3
    %v100 = vmul.f32 %v85, %v98
    %v102 = vrot.slane %v100, 4
    %v104 = vmul.f32 %v47, %v102
    %s105 = scalar_lea.vmem [#allocation5], 16
    %v106 = vld [vmem:[%s105] sm:$0xf]
    %v107 = vlaneseq
    %v108 = vshrl.u32 %v107, 7
    %v109 = vsub.s32 4, %v108
    %v110 = vrot.slane %v104, %v109
    %v111 = vmul.f32 %v110, %v106
    %v112 = vadd.f32 %v97, %v111
    %v113 = vrot.slane %v48, 4
    %v115 = vmul.f32 %v100, %v113
    %v117 = vrot.slane %v115, 3
    %v119 = vmul.f32 %v47, %v117
    %s120 = scalar_lea.vmem [#allocation5], 20
    %v121 = vld [vmem:[%s120] sm:$0xf]
    %v122 = vlaneseq
    %v123 = vshrl.u32 %v122, 7
    %v124 = vsub.s32 5, %v123
    %v125 = vrot.slane %v119, %v124
    %v126 = vmul.f32 %v125, %v121
    %v127 = vadd.f32 %v112, %v126
    %v128 = vrot.slane %v48, 5
    %v130 = vmul.f32 %v115, %v128
    %v132 = vrot.slane %v130, 2
    %v134 = vmul.f32 %v47, %v132
    %s135 = scalar_lea.vmem [#allocation5], 24
    %v136 = vld [vmem:[%s135] sm:$0xf]
    %v137 = vlaneseq
    %v138 = vshrl.u32 %v137, 7
    %v139 = vsub.s32 6, %v138
    %v140 = vrot.slane %v134, %v139
    %v141 = vmul.f32 %v140, %v136
    %v142 = vadd.f32 %v127, %v141
    %v143 = vrot.slane %v48, 6
    %v145 = vmul.f32 %v130, %v143
    %v147 = vrot.slane %v145, 1
    %v149 = vmul.f32 %v47, %v147
    %s150 = scalar_lea.vmem [#allocation5], 28
    %v151 = vld [vmem:[%s150] sm:$0xf]
    %v152 = vlaneseq
    %v153 = vshrl.u32 %v152, 7
    %v154 = vsub.s32 7, %v153
    %v155 = vrot.slane %v149, %v154
    %v156 = vmul.f32 %v155, %v151
    %v157 = vadd.f32 %v142, %v156
    %v158 = vmul.f32 %v145, %v57
    %v159 = vsub.f32 1.0, %v158
    %v161 = vrot.slane %v159, 4
    %vm163 = vcmask 1043456
    %v164 = vsel %vm163, %v157, %v161
    %165 = vst [vmem:[#allocation7] sm:$0x1f] %v164
    // Predicated region
    $region18: #{tpu_custom_call.1} parent=1 // pred_check
      _
    $region19: #{tpu_custom_call.1} parent=1 // pred_check_branch
      %167 = sbr.rel (0) target = $region21
    $region20: #{tpu_custom_call.1} parent=1 // pred_region
      %s169 = ssub.s32 128, 128
      %170 = vsyncadd [#allocation4], %s169
      %s172 = sshll.u32 [#allocation7], 4
      %s173 = int_to_ptr.vmem [resolvable:$true] %s172
      %175 = dma.vmem_to_hbm [thread:$0]  %s173, 128, %s2, [#allocation4]
    $region21: #{tpu_custom_call.1} parent=1 // pred_fallthru
      _
    // Predicated region
    $region22: #{tpu_custom_call.1} parent=1 // pred_check
      _
    $region23: #{tpu_custom_call.1} parent=1 // pred_check_branch
      %177 = sbr.rel (0) target = $region25
    $region24: #{tpu_custom_call.1} parent=1 // pred_region
      %178 = dma.done [#allocation4], 128
    $region25: #{tpu_custom_call.1} parent=1 // pred_fallthru
      _
    %179 = vsyncpa [#allocation3], 1
    %180 = vsyncpa [#allocation6], 1
    %181 = vsyncpa [#allocation4], 1

</llo_original>
